<compile_context>
chip_gen: v7x
topology: tpu7x:2x2x1
jax: 0.10.0
libtpu: 0.0.40
codegen_flags: <defaults>
</compile_context>

<pallas_src>
import functools

import jax
import jax.numpy as jnp
from jax.experimental import pallas as pl
from jax.experimental.pallas import tpu as pltpu

_LANE = 128


def _round_up(a, b):
    return (a + b - 1) // b * b


def _decoder_kernel(x_ref, mask_ref, lab_ref,
                    w1_ref, b1_ref, g_ref, beta_ref, w2_ref, b2_ref,
                    prob_ref, part_ref, *, num_tags, pad_id, eps):
    # x arrives in its native dtype; cast to bf16 per-tile so the wrapper never
    # materializes a casted / padded copy of the largest tensor in HBM.
    x = x_ref[...].astype(jnp.bfloat16)

    # Linear(H, H) + ReLU  (bf16 operands, f32 accumulation on the MXU).
    h = jnp.dot(x, w1_ref[...], preferred_element_type=jnp.float32) + b1_ref[...]
    h = jnp.maximum(h, 0.0)

    # LayerNorm(H)  (biased variance, eps, affine) -- f32 math.
    mean = jnp.mean(h, axis=-1, keepdims=True)
    cen = h - mean
    var = jnp.mean(cen * cen, axis=-1, keepdims=True)
    hn = cen * jax.lax.rsqrt(var + eps) * g_ref[...] + beta_ref[...]

    # Linear(H, num_tags) on a lane-dense (128-padded) tag axis; bf16 operands,
    # f32 accumulation (f32xf32 would run multi-pass on the MXU).
    logits = jnp.dot(hn.astype(jnp.bfloat16), w2_ref[...],
                     preferred_element_type=jnp.float32) + b2_ref[...]

    # Row mask: equivalent to torch's `logits += (1 - mask) * -1e32` in f32.
    mask = mask_ref[...]                                     # (TM, 1) f32
    logits = jnp.where(mask > 0.0, logits, jnp.float32(-1e32))

    tag_ids = jax.lax.broadcasted_iota(jnp.int32, logits.shape, 1)
    lab = lab_ref[...]                                       # (TM, 1) i32
    # Logit at the target tag (labels < num_tags, so always a real lane).
    picked = jnp.sum(jnp.where(tag_ids == lab, logits, 0.0),
                     axis=-1, keepdims=True)

    # Padded tag lanes must never contribute to softmax / logsumexp.
    sm_logits = jnp.where(tag_ids < num_tags, logits, jnp.float32(-jnp.inf))

    # Softmax over the real tags; EXACT normalization so rows sum to 1.
    m = jnp.max(sm_logits, axis=-1, keepdims=True)           # finite (>= -1e32)
    e = jnp.exp(sm_logits - m)                               # padded lanes -> 0
    s = jnp.sum(e, axis=-1, keepdims=True)
    prob_ref[...] = (e * (1.0 / s)).astype(prob_ref.dtype)

    # Per-token cross-entropy on the masked logits; ignore label == pad_id.
    logz = m + jnp.log(s)                                    # (TM, 1)
    valid = (lab != pad_id).astype(jnp.float32)
    nll_sum = jnp.sum((logz - picked) * valid)               # scalar
    valid_sum = jnp.sum(valid)                               # scalar

    # One lane-dense (1, 8, 128) partial block per grid step:
    #   [0,0,0] = sum of NLL over this tile, [0,0,1] = number of valid tokens.
    sub = jax.lax.broadcasted_iota(jnp.int32, (1, 8, _LANE), 1)
    lane = jax.lax.broadcasted_iota(jnp.int32, (1, 8, _LANE), 2)
    part_ref[...] = jnp.where(
        (sub == 0) & (lane == 0), nll_sum,
        jnp.where((sub == 0) & (lane == 1), valid_sum, jnp.float32(0.0)))


def _pick_tile(n_rows, H, tagp, x_itemsize, tile_rows):
    """Generation-aware row-tile + VMEM-limit selection (v5e/v6e vs v7x)."""
    try:
        cap = int(pltpu.get_tpu_info().vmem_capacity_bytes)
    except Exception:                       # no TPU visible / interpret mode
        cap = 64 * 1024 * 1024              # conservative: v7x per-TC VMEM
    vmem_limit = max(32 * 1024 * 1024, min(cap * 3 // 4, 96 * 1024 * 1024))

    if tile_rows is None:
        # Bytes scaling with the row tile: double-buffered x and prob blocks,
        # lane-padded (tm,1) mask/label blocks, and ~8 row-wide f32 live
        # intermediates inside the body (h, cen, hn, logits, e, ...).
        per_row = (2 * x_itemsize * H) + (2 * 4 * tagp) + (2 * 2 * 4 * _LANE) \
                  + (8 * 4 * max(H, _LANE))
        # Single-buffered (pl.Buffered(1)) weights: bf16 w1/w2 + f32 vectors.
        weight_bytes = 2 * H * H + 2 * H * tagp + 4 * 4 * max(H, tagp) + 4 * tagp
        budget = int(vmem_limit * 0.6) - weight_bytes
        tile_rows = max(budget // max(per_row, 1), 8)
        tile_rows = min(tile_rows, 1024)
        if tile_rows >= 256:
            tile_rows = (tile_rows // 256) * 256   # MXU-friendly (256x256 v6e/v7x)
        else:
            tile_rows = max((tile_rows // 8) * 8, 8)

    tm = min(int(tile_rows), _round_up(n_rows, 8))   # don't over-pad tiny inputs
    tm = max(_round_up(tm, 8), 8)
    return tm, vmem_limit


def tagging_fnn_decoder_forward(hiddens, mask, labels, params, pad_id,
                                *, tile_rows=None):
    """Returns (prob, loss) matching TaggingFNNDecoder.forward(hiddens, mask, labels)."""
    B, T, H = hiddens.shape
    w1, b1, gamma, beta, w2, b2 = params
    num_tags = w2.shape[1]
    N = B * T
    tagp = _round_up(num_tags, _LANE)     # lane-dense tag axis

    x_itemsize = jnp.dtype(hiddens.dtype).itemsize
    tm, vmem_limit = _pick_tile(N, H, tagp, x_itemsize, tile_rows)
    n_pad = _round_up(N, tm)
    num_tiles = n_pad // tm

    # x stays in its native dtype, UNPADDED (reshape is a free view).  A ragged
    # last row tile reads past N; those rows are neutralized in-kernel by
    # mask == 0 (jnp.where kills garbage/NaN logits) and label == pad_id.
    x = hiddens.reshape(N, H)
    m2 = mask.reshape(N, 1).astype(jnp.float32)
    lab2 = labels.reshape(N, 1).astype(jnp.int32)
    extra = n_pad - N
    if extra:  # only the tiny per-token streams are padded
        m2 = jnp.pad(m2, ((0, extra), (0, 0)))                            # mask=0
        lab2 = jnp.pad(lab2, ((0, extra), (0, 0)), constant_values=pad_id)

    w1b = jnp.asarray(w1, jnp.bfloat16)                                   # (H, H)
    b1r = jnp.asarray(b1, jnp.float32).reshape(1, H)
    gr = jnp.asarray(gamma, jnp.float32).reshape(1, H)
    br = jnp.asarray(beta, jnp.float32).reshape(1, H)
    w2b = jnp.zeros((H, tagp), jnp.bfloat16).at[:, :num_tags].set(
        jnp.asarray(w2, jnp.bfloat16))                                    # bf16
    b2r = jnp.zeros((1, tagp), jnp.float32).at[:, :num_tags].set(
        jnp.asarray(b2, jnp.float32).reshape(1, num_tags))

    kernel = functools.partial(_decoder_kernel, num_tags=num_tags,
                               pad_id=pad_id, eps=1e-5)

    weight_bytes = (w1b.size * 2 + w2b.size * 2
                    + (b1r.size + gr.size + br.size + b2r.size) * 4)
    cost = pl.CostEstimate(
        flops=2 * n_pad * H * (H + tagp),
        transcendentals=n_pad * (tagp + 3),               # exp + log/rsqrt/div
        bytes_accessed=(N * H * x_itemsize                # x (native dtype)
                        + n_pad * 8                       # mask, labels
                        + n_pad * tagp * 4                # prob
                        + num_tiles * 8 * _LANE * 4       # loss partials
                        + weight_bytes))

    def call(single_buffer_weights):
        def const(r, c):
            if single_buffer_weights:
                # Constant-index weight blocks need only ONE pipeline buffer.
                return pl.BlockSpec((r, c), lambda i: (0, 0),
                                    pipeline_mode=pl.Buffered(1))
            return pl.BlockSpec((r, c), lambda i: (0, 0))

        row = lambda last: pl.BlockSpec((tm, last), lambda i: (i, 0))
        return pl.pallas_call(
            kernel,
            out_shape=(
                jax.ShapeDtypeStruct((n_pad, tagp), jnp.float32),
                jax.ShapeDtypeStruct((num_tiles, 8, _LANE), jnp.float32),
            ),
            grid=(num_tiles,),
            in_specs=[
                row(H),              # x (native dtype, cast in-kernel)
                row(1),              # mask
                row(1),              # labels
                const(H, H),         # w1 (bf16)
                const(1, H),         # b1
                const(1, H),         # gamma
                const(1, H),         # beta
                const(H, tagp),      # w2 (bf16, zero-padded tag lanes)
                const(1, tagp),      # b2 (zero-padded tag lanes)
            ],
            out_specs=[
                pl.BlockSpec((tm, tagp), lambda i: (i, 0)),        # lane-dense
                pl.BlockSpec((1, 8, _LANE), lambda i: (i, 0, 0)),  # partials
            ],
            compiler_params=pltpu.CompilerParams(
                dimension_semantics=("parallel",),   # shards across TCs on v7x
                vmem_limit_bytes=int(vmem_limit)),
            cost_estimate=cost,
        )(x, m2, lab2, w1b, b1r, gr, br, w2b, b2r)

    try:
        prob_flat, partials = call(True)
        jax.block_until_ready((prob_flat, partials))
    except Exception:
        # pl.Buffered(1) is a pure VMEM-saving hint; fall back to the default
        # double-buffered weight blocks if this JAX / backend rejects it.
        prob_flat, partials = call(False)

    prob = prob_flat[:N, :num_tags].reshape(B, T, num_tags)

    # CrossEntropyLoss(ignore_index=pad_id): mean over non-ignored tokens.
    nll_sum = jnp.sum(partials[:, 0, 0])
    count = jnp.sum(partials[:, 0, 1])
    loss = nll_sum / jnp.maximum(count, 1.0)
    return prob, loss


def make_params(key, input_size, num_tags):
    """Deterministic synthetic parameters (Linear, LayerNorm, Linear)."""
    k1, k2, k3, k4 = jax.random.split(key, 4)
    s1 = 1.0 / jnp.sqrt(input_size)
    w1 = jax.random.uniform(k1, (input_size, input_size), jnp.float32, -s1, s1)
    b1 = jax.random.uniform(k2, (1, input_size), jnp.float32, -s1, s1)
    gamma = jnp.ones((1, input_size), jnp.float32)
    beta = jnp.zeros((1, input_size), jnp.float32)
    w2 = jax.random.uniform(k3, (input_size, num_tags), jnp.float32, -s1, s1)
    b2 = jax.random.uniform(k4, (1, num_tags), jnp.float32, -s1, s1)
    return w1, b1, gamma, beta, w2, b2


def reference_forward(hiddens, mask, labels, params, pad_id):
    """Pure-JAX f32 reference mirroring the torch module."""
    w1, b1, gamma, beta, w2, b2 = params
    h = jnp.maximum(hiddens @ w1 + b1.reshape(-1), 0.0)
    mu = jnp.mean(h, axis=-1, keepdims=True)
    var = jnp.mean((h - mu) ** 2, axis=-1, keepdims=True)
    hn = (h - mu) * jax.lax.rsqrt(var + 1e-5) * gamma.reshape(-1) + beta.reshape(-1)
    logits = hn @ w2 + b2.reshape(-1)
    logits = logits + (1.0 - mask)[..., None] * jnp.float32(-1e32)
    prob = jax.nn.softmax(logits, axis=-1)
    flat = logits.reshape(-1, logits.shape[-1])
    lab = labels.reshape(-1)
    logz = jax.nn.logsumexp(flat, axis=-1)
    picked = jnp.take_along_axis(flat, lab[:, None], axis=1)[:, 0]
    valid = lab != pad_id
    loss = jnp.sum(jnp.where(valid, logz - picked, 0.0)) / jnp.maximum(
        jnp.sum(valid), 1)
    return prob, loss


if __name__ == "__main__":
    B, T, H, NUM_TAGS, PAD_ID = 2, 8, 32, 16, 0

    key = jax.random.PRNGKey(0)
    k_h, k_p, k_l = jax.random.split(key, 3)

    hiddens = jax.random.normal(k_h, (B, T, H), jnp.float32)
    # mask: 1 for real tokens, 0 for padding (last two positions of each seq).
    mask = jnp.concatenate(
        [jnp.ones((B, T - 2), jnp.float32), jnp.zeros((B, 2), jnp.float32)], axis=1)
    labels_real = jax.random.randint(k_l, (B, T), 1, NUM_TAGS)
    labels = jnp.where(mask > 0, labels_real, PAD_ID).astype(jnp.int32)

    params = make_params(k_p, H, NUM_TAGS)

    prob, loss = tagging_fnn_decoder_forward(hiddens, mask, labels, params, PAD_ID)
    jax.block_until_ready((prob, loss))

    prob_ref, loss_ref = reference_forward(hiddens, mask, labels, params, PAD_ID)

    assert prob.shape == (B, T, NUM_TAGS)
    # Exact in-kernel normalization -> rows sum to 1 up to f32 rounding.
    assert jnp.allclose(jnp.sum(prob, axis=-1), 1.0, atol=1e-3)
    # bf16 matmul operands (f32 accumulation) -> loose tolerance vs f32 ref.
    assert jnp.allclose(prob, prob_ref, atol=5e-2)
    assert jnp.isfinite(loss)
    assert abs(float(loss) - float(loss_ref)) <= 5e-2 * (1.0 + abs(float(loss_ref)))

    print("KERNEL_OK")
</pallas_src>

<mosaic_0001>
module attributes {stable_mosaic.version = 11 : i64} {
  func.func @_decoder_kernel(%arg0: i32, %arg1: memref<16x32xf32, #tpu.memory_space<vmem>>, %arg2: memref<16x1xf32, #tpu.memory_space<vmem>>, %arg3: memref<16x1xi32, #tpu.memory_space<vmem>>, %arg4: memref<32x32xbf16, #tpu.memory_space<vmem>>, %arg5: memref<1x32xf32, #tpu.memory_space<vmem>>, %arg6: memref<1x32xf32, #tpu.memory_space<vmem>>, %arg7: memref<1x32xf32, #tpu.memory_space<vmem>>, %arg8: memref<32x128xbf16, #tpu.memory_space<vmem>>, %arg9: memref<1x128xf32, #tpu.memory_space<vmem>>, %arg10: memref<16x128xf32, #tpu.memory_space<vmem>>, %arg11: memref<1x8x128xf32, #tpu.memory_space<vmem>>) attributes {dimension_semantics = [#tpu.dimension_semantics<parallel>], iteration_bounds = array<i64: 1>, scalar_prefetch = 0 : i64, scratch_operands = 0 : i64, tpu.core_type = #tpu.core_type<tc>, window_params = [{transform_indices = @transform_0, window_bounds = array<i64: 16, 32>}, {transform_indices = @transform_1, window_bounds = array<i64: 16, 1>}, {transform_indices = @transform_2, window_bounds = array<i64: 16, 1>}, {pipeline_mode = #tpu.pipeline_mode<synchronous>, transform_indices = @transform_3, window_bounds = array<i64: 32, 32>}, {pipeline_mode = #tpu.pipeline_mode<synchronous>, transform_indices = @transform_4, window_bounds = array<i64: 1, 32>}, {pipeline_mode = #tpu.pipeline_mode<synchronous>, transform_indices = @transform_5, window_bounds = array<i64: 1, 32>}, {pipeline_mode = #tpu.pipeline_mode<synchronous>, transform_indices = @transform_6, window_bounds = array<i64: 1, 32>}, {pipeline_mode = #tpu.pipeline_mode<synchronous>, transform_indices = @transform_7, window_bounds = array<i64: 32, 128>}, {pipeline_mode = #tpu.pipeline_mode<synchronous>, transform_indices = @transform_8, window_bounds = array<i64: 1, 128>}, {transform_indices = @transform_9, window_bounds = array<i64: 16, 128>}, {transform_indices = @transform_10, window_bounds = array<i64: 1, 8, 128>}]} {
    %c0 = arith.constant 0 : index
    %c0_0 = arith.constant 0 : index
    %0 = vector.load %arg1[%c0, %c0_0] : memref<16x32xf32, #tpu.memory_space<vmem>>, vector<16x32xf32>
    %1 = arith.truncf %0 : vector<16x32xf32> to vector<16x32xbf16>
    %c0_1 = arith.constant 0 : index
    %c0_2 = arith.constant 0 : index
    %2 = vector.load %arg4[%c0_1, %c0_2] : memref<32x32xbf16, #tpu.memory_space<vmem>>, vector<32x32xbf16>
    %cst = arith.constant dense<0.000000e+00> : vector<16x32xf32>
    %3 = tpu.matmul %1, %2, %cst {dimension_numbers = #tpu.dot_dimension_numbers<[1], [0], [0], [1], [0, 0, 1, 1], [], []>} : vector<16x32xbf16>, vector<32x32xbf16>, vector<16x32xf32> -> vector<16x32xf32>
    %c0_3 = arith.constant 0 : index
    %c0_4 = arith.constant 0 : index
    %4 = vector.load %arg5[%c0_3, %c0_4] : memref<1x32xf32, #tpu.memory_space<vmem>>, vector<1x32xf32>
    %5 = vector.broadcast %4 : vector<1x32xf32> to vector<16x32xf32>
    %6 = arith.addf %3, %5 : vector<16x32xf32>
    %cst_5 = arith.constant 0.000000e+00 : f32
    %7 = vector.broadcast %cst_5 : f32 to vector<16x32xf32>
    %8 = arith.maximumf %6, %7 : vector<16x32xf32>
    %cst_6 = arith.constant dense<0.000000e+00> : vector<16xf32>
    %9 = vector.multi_reduction <add>, %8, %cst_6 [1] : vector<16x32xf32> to vector<16xf32>
    %10 = vector.shape_cast %9 : vector<16xf32> to vector<16x1xf32>
    %cst_7 = arith.constant 3.200000e+01 : f32
    %11 = vector.broadcast %cst_7 : f32 to vector<16x1xf32>
    %12 = arith.divf %10, %11 : vector<16x1xf32>
    %13 = vector.broadcast %12 : vector<16x1xf32> to vector<16x32xf32>
    %14 = arith.subf %8, %13 : vector<16x32xf32>
    %15 = arith.mulf %14, %14 : vector<16x32xf32>
    %cst_8 = arith.constant dense<0.000000e+00> : vector<16xf32>
    %16 = vector.multi_reduction <add>, %15, %cst_8 [1] : vector<16x32xf32> to vector<16xf32>
    %17 = vector.shape_cast %16 : vector<16xf32> to vector<16x1xf32>
    %cst_9 = arith.constant 3.200000e+01 : f32
    %18 = vector.broadcast %cst_9 : f32 to vector<16x1xf32>
    %19 = arith.divf %17, %18 : vector<16x1xf32>
    %cst_10 = arith.constant 9.99999974E-6 : f32
    %20 = vector.broadcast %cst_10 : f32 to vector<16x1xf32>
    %21 = arith.addf %19, %20 : vector<16x1xf32>
    %22 = math.rsqrt %21 : vector<16x1xf32>
    %23 = vector.broadcast %22 : vector<16x1xf32> to vector<16x32xf32>
    %24 = arith.mulf %14, %23 : vector<16x32xf32>
    %c0_11 = arith.constant 0 : index
    %c0_12 = arith.constant 0 : index
    %25 = vector.load %arg6[%c0_11, %c0_12] : memref<1x32xf32, #tpu.memory_space<vmem>>, vector<1x32xf32>
    %26 = vector.broadcast %25 : vector<1x32xf32> to vector<16x32xf32>
    %27 = arith.mulf %24, %26 : vector<16x32xf32>
    %c0_13 = arith.constant 0 : index
    %c0_14 = arith.constant 0 : index
    %28 = vector.load %arg7[%c0_13, %c0_14] : memref<1x32xf32, #tpu.memory_space<vmem>>, vector<1x32xf32>
    %29 = vector.broadcast %28 : vector<1x32xf32> to vector<16x32xf32>
    %30 = arith.addf %27, %29 : vector<16x32xf32>
    %31 = arith.truncf %30 : vector<16x32xf32> to vector<16x32xbf16>
    %c0_15 = arith.constant 0 : index
    %c0_16 = arith.constant 0 : index
    %32 = vector.load %arg8[%c0_15, %c0_16] : memref<32x128xbf16, #tpu.memory_space<vmem>>, vector<32x128xbf16>
    %cst_17 = arith.constant dense<0.000000e+00> : vector<16x128xf32>
    %33 = tpu.matmul %31, %32, %cst_17 {dimension_numbers = #tpu.dot_dimension_numbers<[1], [0], [0], [1], [0, 0, 1, 1], [], []>} : vector<16x32xbf16>, vector<32x128xbf16>, vector<16x128xf32> -> vector<16x128xf32>
    %c0_18 = arith.constant 0 : index
    %c0_19 = arith.constant 0 : index
    %34 = vector.load %arg9[%c0_18, %c0_19] : memref<1x128xf32, #tpu.memory_space<vmem>>, vector<1x128xf32>
    %35 = vector.broadcast %34 : vector<1x128xf32> to vector<16x128xf32>
    %36 = arith.addf %33, %35 : vector<16x128xf32>
    %c0_20 = arith.constant 0 : index
    %c0_21 = arith.constant 0 : index
    %37 = vector.load %arg2[%c0_20, %c0_21] : memref<16x1xf32, #tpu.memory_space<vmem>>, vector<16x1xf32>
    %cst_22 = arith.constant 0.000000e+00 : f32
    %38 = vector.broadcast %cst_22 : f32 to vector<16x1xf32>
    %39 = arith.cmpf ogt, %37, %38 : vector<16x1xf32>
    %cst_23 = arith.constant -1.000000e+32 : f32
    %40 = vector.shape_cast %39 : vector<16x1xi1> to vector<16x1xi1>
    %41 = vector.broadcast %40 : vector<16x1xi1> to vector<16x128xi1>
    %42 = vector.broadcast %cst_23 : f32 to vector<16x128xf32>
    %43 = arith.select %41, %36, %42 : vector<16x128xi1>, vector<16x128xf32>
    %44 = tpu.iota {dimensions = array<i32: 1>} : vector<16x128xi32>
    %c0_24 = arith.constant 0 : index
    %c0_25 = arith.constant 0 : index
    %45 = vector.load %arg3[%c0_24, %c0_25] : memref<16x1xi32, #tpu.memory_space<vmem>>, vector<16x1xi32>
    %46 = vector.broadcast %45 : vector<16x1xi32> to vector<16x128xi32>
    %47 = arith.cmpi eq, %44, %46 : vector<16x128xi32>
    %cst_26 = arith.constant 0.000000e+00 : f32
    %48 = vector.broadcast %cst_26 : f32 to vector<16x128xf32>
    %49 = arith.select %47, %43, %48 : vector<16x128xi1>, vector<16x128xf32>
    %cst_27 = arith.constant dense<0.000000e+00> : vector<16xf32>
    %50 = vector.multi_reduction <add>, %49, %cst_27 [1] : vector<16x128xf32> to vector<16xf32>
    %51 = vector.shape_cast %50 : vector<16xf32> to vector<16x1xf32>
    %c16_i32 = arith.constant 16 : i32
    %52 = vector.broadcast %c16_i32 : i32 to vector<16x128xi32>
    %53 = arith.cmpi slt, %44, %52 : vector<16x128xi32>
    %cst_28 = arith.constant 0xFF800000 : f32
    %54 = vector.broadcast %cst_28 : f32 to vector<16x128xf32>
    %55 = arith.select %53, %43, %54 : vector<16x128xi1>, vector<16x128xf32>
    %cst_29 = arith.constant dense<0xFF800000> : vector<16xf32>
    %56 = vector.multi_reduction <maximumf>, %55, %cst_29 [1] : vector<16x128xf32> to vector<16xf32>
    %57 = vector.shape_cast %56 : vector<16xf32> to vector<16x1xf32>
    %58 = vector.broadcast %57 : vector<16x1xf32> to vector<16x128xf32>
    %59 = arith.subf %55, %58 : vector<16x128xf32>
    %60 = math.exp %59 : vector<16x128xf32>
    %cst_30 = arith.constant dense<0.000000e+00> : vector<16xf32>
    %61 = vector.multi_reduction <add>, %60, %cst_30 [1] : vector<16x128xf32> to vector<16xf32>
    %62 = vector.shape_cast %61 : vector<16xf32> to vector<16x1xf32>
    %cst_31 = arith.constant 1.000000e+00 : f32
    %63 = vector.broadcast %cst_31 : f32 to vector<16x1xf32>
    %64 = arith.divf %63, %62 : vector<16x1xf32>
    %65 = vector.broadcast %64 : vector<16x1xf32> to vector<16x128xf32>
    %66 = arith.mulf %60, %65 : vector<16x128xf32>
    %c0_32 = arith.constant 0 : index
    %c0_33 = arith.constant 0 : index
    %67 = vector.load %arg10[%c0_32, %c0_33] : memref<16x128xf32, #tpu.memory_space<vmem>>, vector<16x128xf32>
    tpu.vector_store %arg10[%c0_32, %c0_33], %66 {strides = array<i32>} : memref<16x128xf32, #tpu.memory_space<vmem>>, vector<16x128xf32>,
    %68 = math.log %62 : vector<16x1xf32>
    %69 = arith.addf %57, %68 : vector<16x1xf32>
    %c0_i32 = arith.constant 0 : i32
    %70 = vector.broadcast %c0_i32 : i32 to vector<16x1xi32>
    %71 = arith.cmpi ne, %45, %70 : vector<16x1xi32>
    %72 = arith.extui %71 : vector<16x1xi1> to vector<16x1xi32>
    %73 = arith.sitofp %72 : vector<16x1xi32> to vector<16x1xf32>
    %74 = arith.subf %69, %51 : vector<16x1xf32>
    %75 = arith.mulf %74, %73 : vector<16x1xf32>
    %76 = vector.shape_cast %75 : vector<16x1xf32> to vector<1x16x1xf32>
    %cst_34 = arith.constant dense<0.000000e+00> : vector<1xf32>
    %77 = vector.multi_reduction <add>, %76, %cst_34 [1, 2] : vector<1x16x1xf32> to vector<1xf32>
    %78 = vector.shape_cast %77 : vector<1xf32> to vector<1x1x1xf32>
    %79 = vector.extract %78[0, 0, 0] : f32 from vector<1x1x1xf32>
    %80 = vector.shape_cast %73 : vector<16x1xf32> to vector<1x16x1xf32>
    %cst_35 = arith.constant dense<0.000000e+00> : vector<1xf32>
    %81 = vector.multi_reduction <add>, %80, %cst_35 [1, 2] : vector<1x16x1xf32> to vector<1xf32>
    %82 = vector.shape_cast %81 : vector<1xf32> to vector<1x1x1xf32>
    %83 = vector.extract %82[0, 0, 0] : f32 from vector<1x1x1xf32>
    %84 = tpu.iota {dimensions = array<i32: 1>} : vector<1x8x128xi32>
    %85 = tpu.iota {dimensions = array<i32: 2>} : vector<1x8x128xi32>
    %c0_i32_36 = arith.constant 0 : i32
    %86 = vector.broadcast %c0_i32_36 : i32 to vector<1x8x128xi32>
    %87 = arith.cmpi eq, %84, %86 : vector<1x8x128xi32>
    %c0_i32_37 = arith.constant 0 : i32
    %88 = vector.broadcast %c0_i32_37 : i32 to vector<1x8x128xi32>
    %89 = arith.cmpi eq, %85, %88 : vector<1x8x128xi32>
    %90 = arith.andi %87, %89 : vector<1x8x128xi1>
    %c0_i32_38 = arith.constant 0 : i32
    %91 = vector.broadcast %c0_i32_38 : i32 to vector<1x8x128xi32>
    %92 = arith.cmpi eq, %84, %91 : vector<1x8x128xi32>
    %c1_i32 = arith.constant 1 : i32
    %93 = vector.broadcast %c1_i32 : i32 to vector<1x8x128xi32>
    %94 = arith.cmpi eq, %85, %93 : vector<1x8x128xi32>
    %95 = arith.andi %92, %94 : vector<1x8x128xi1>
    %cst_39 = arith.constant 0.000000e+00 : f32
    %96 = vector.broadcast %83 : f32 to vector<1x8x128xf32>
    %97 = vector.broadcast %cst_39 : f32 to vector<1x8x128xf32>
    %98 = arith.select %95, %96, %97 : vector<1x8x128xi1>, vector<1x8x128xf32>
    %99 = vector.broadcast %79 : f32 to vector<1x8x128xf32>
    %100 = arith.select %90, %99, %98 : vector<1x8x128xi1>, vector<1x8x128xf32>
    %c0_40 = arith.constant 0 : index
    %c0_41 = arith.constant 0 : index
    %c0_42 = arith.constant 0 : index
    %101 = vector.load %arg11[%c0_40, %c0_41, %c0_42] : memref<1x8x128xf32, #tpu.memory_space<vmem>>, vector<1x8x128xf32>
    tpu.vector_store %arg11[%c0_40, %c0_41, %c0_42], %100 {strides = array<i32>} : memref<1x8x128xf32, #tpu.memory_space<vmem>>, vector<1x8x128xf32>,
    return
  }
  func.func @transform_0(%arg0: i32) -> (i32, i32) {
    %c0_i32 = arith.constant 0 : i32
    %c0_i32_0 = arith.constant 0 : i32
    return %arg0, %c0_i32 : i32, i32
  }
  func.func @transform_1(%arg0: i32) -> (i32, i32) {
    %c0_i32 = arith.constant 0 : i32
    %c0_i32_0 = arith.constant 0 : i32
    return %arg0, %c0_i32 : i32, i32
  }
  func.func @transform_2(%arg0: i32) -> (i32, i32) {
    %c0_i32 = arith.constant 0 : i32
    %c0_i32_0 = arith.constant 0 : i32
    return %arg0, %c0_i32 : i32, i32
  }
  func.func @transform_3(%arg0: i32) -> (i32, i32) {
    %c0_i32 = arith.constant 0 : i32
    %c0_i32_0 = arith.constant 0 : i32
    %c0_i32_1 = arith.constant 0 : i32
    return %c0_i32, %c0_i32_0 : i32, i32
  }
  func.func @transform_4(%arg0: i32) -> (i32, i32) {
    %c0_i32 = arith.constant 0 : i32
    %c0_i32_0 = arith.constant 0 : i32
    %c0_i32_1 = arith.constant 0 : i32
    return %c0_i32, %c0_i32_0 : i32, i32
  }
  func.func @transform_5(%arg0: i32) -> (i32, i32) {
    %c0_i32 = arith.constant 0 : i32
    %c0_i32_0 = arith.constant 0 : i32
    %c0_i32_1 = arith.constant 0 : i32
    return %c0_i32, %c0_i32_0 : i32, i32
  }
  func.func @transform_6(%arg0: i32) -> (i32, i32) {
    %c0_i32 = arith.constant 0 : i32
    %c0_i32_0 = arith.constant 0 : i32
    %c0_i32_1 = arith.constant 0 : i32
    return %c0_i32, %c0_i32_0 : i32, i32
  }
  func.func @transform_7(%arg0: i32) -> (i32, i32) {
    %c0_i32 = arith.constant 0 : i32
    %c0_i32_0 = arith.constant 0 : i32
    %c0_i32_1 = arith.constant 0 : i32
    return %c0_i32, %c0_i32_0 : i32, i32
  }
  func.func @transform_8(%arg0: i32) -> (i32, i32) {
    %c0_i32 = arith.constant 0 : i32
    %c0_i32_0 = arith.constant 0 : i32
    %c0_i32_1 = arith.constant 0 : i32
    return %c0_i32, %c0_i32_0 : i32, i32
  }
  func.func @transform_9(%arg0: i32) -> (i32, i32) {
    %c0_i32 = arith.constant 0 : i32
    %c0_i32_0 = arith.constant 0 : i32
    return %arg0, %c0_i32 : i32, i32
  }
  func.func @transform_10(%arg0: i32) -> (i32, i32, i32) {
    %c0_i32 = arith.constant 0 : i32
    %c0_i32_0 = arith.constant 0 : i32
    %c0_i32_1 = arith.constant 0 : i32
    return %arg0, %c0_i32, %c0_i32_0 : i32, i32, i32
  }
}

module attributes {stable_mosaic.version = 11 : i64} {
  func.func @_decoder_kernel(%arg0: i32, %arg1: memref<16x32xf32, #tpu.memory_space<vmem>>, %arg2: memref<16x1xf32, #tpu.memory_space<vmem>>, %arg3: memref<16x1xi32, #tpu.memory_space<vmem>>, %arg4: memref<32x32xbf16, #tpu.memory_space<vmem>>, %arg5: memref<1x32xf32, #tpu.memory_space<vmem>>, %arg6: memref<1x32xf32, #tpu.memory_space<vmem>>, %arg7: memref<1x32xf32, #tpu.memory_space<vmem>>, %arg8: memref<32x128xbf16, #tpu.memory_space<vmem>>, %arg9: memref<1x128xf32, #tpu.memory_space<vmem>>, %arg10: memref<16x128xf32, #tpu.memory_space<vmem>>, %arg11: memref<1x8x128xf32, #tpu.memory_space<vmem>>) attributes {dimension_semantics = [#tpu.dimension_semantics<parallel>], iteration_bounds = array<i64: 1>, scalar_prefetch = 0 : i64, scratch_operands = 0 : i64, tpu.core_type = #tpu.core_type<tc>, window_params = [{transform_indices = @transform_0, window_bounds = array<i64: 16, 32>}, {transform_indices = @transform_1, window_bounds = array<i64: 16, 1>}, {transform_indices = @transform_2, window_bounds = array<i64: 16, 1>}, {pipeline_mode = #tpu.pipeline_mode<synchronous>, transform_indices = @transform_3, window_bounds = array<i64: 32, 32>}, {pipeline_mode = #tpu.pipeline_mode<synchronous>, transform_indices = @transform_4, window_bounds = array<i64: 1, 32>}, {pipeline_mode = #tpu.pipeline_mode<synchronous>, transform_indices = @transform_5, window_bounds = array<i64: 1, 32>}, {pipeline_mode = #tpu.pipeline_mode<synchronous>, transform_indices = @transform_6, window_bounds = array<i64: 1, 32>}, {pipeline_mode = #tpu.pipeline_mode<synchronous>, transform_indices = @transform_7, window_bounds = array<i64: 32, 128>}, {pipeline_mode = #tpu.pipeline_mode<synchronous>, transform_indices = @transform_8, window_bounds = array<i64: 1, 128>}, {transform_indices = @transform_9, window_bounds = array<i64: 16, 128>}, {transform_indices = @transform_10, window_bounds = array<i64: 1, 8, 128>}]} {
    %c0 = arith.constant 0 : index
    %c0_0 = arith.constant 0 : index
    %0 = vector.load %arg1[%c0, %c0_0] : memref<16x32xf32, #tpu.memory_space<vmem>>, vector<16x32xf32>
    %1 = arith.truncf %0 : vector<16x32xf32> to vector<16x32xbf16>
    %c0_1 = arith.constant 0 : index
    %c0_2 = arith.constant 0 : index
    %2 = vector.load %arg4[%c0_1, %c0_2] : memref<32x32xbf16, #tpu.memory_space<vmem>>, vector<32x32xbf16>
    %cst = arith.constant dense<0.000000e+00> : vector<16x32xf32>
    %3 = tpu.matmul %1, %2, %cst {dimension_numbers = #tpu.dot_dimension_numbers<[1], [0], [0], [1], [0, 0, 1, 1], [], []>} : vector<16x32xbf16>, vector<32x32xbf16>, vector<16x32xf32> -> vector<16x32xf32>
    %c0_3 = arith.constant 0 : index
    %c0_4 = arith.constant 0 : index
    %4 = vector.load %arg5[%c0_3, %c0_4] : memref<1x32xf32, #tpu.memory_space<vmem>>, vector<1x32xf32>
    %5 = vector.broadcast %4 : vector<1x32xf32> to vector<16x32xf32>
    %6 = arith.addf %3, %5 : vector<16x32xf32>
    %cst_5 = arith.constant 0.000000e+00 : f32
    %7 = vector.broadcast %cst_5 : f32 to vector<16x32xf32>
    %8 = arith.maximumf %6, %7 : vector<16x32xf32>
    %cst_6 = arith.constant dense<0.000000e+00> : vector<16xf32>
    %9 = vector.multi_reduction <add>, %8, %cst_6 [1] : vector<16x32xf32> to vector<16xf32>
    %10 = vector.shape_cast %9 : vector<16xf32> to vector<16x1xf32>
    %cst_7 = arith.constant 3.200000e+01 : f32
    %11 = vector.broadcast %cst_7 : f32 to vector<16x1xf32>
    %12 = arith.divf %10, %11 : vector<16x1xf32>
    %13 = vector.broadcast %12 : vector<16x1xf32> to vector<16x32xf32>
    %14 = arith.subf %8, %13 : vector<16x32xf32>
    %15 = arith.mulf %14, %14 : vector<16x32xf32>
    %cst_8 = arith.constant dense<0.000000e+00> : vector<16xf32>
    %16 = vector.multi_reduction <add>, %15, %cst_8 [1] : vector<16x32xf32> to vector<16xf32>
    %17 = vector.shape_cast %16 : vector<16xf32> to vector<16x1xf32>
    %cst_9 = arith.constant 3.200000e+01 : f32
    %18 = vector.broadcast %cst_9 : f32 to vector<16x1xf32>
    %19 = arith.divf %17, %18 : vector<16x1xf32>
    %cst_10 = arith.constant 9.99999974E-6 : f32
    %20 = vector.broadcast %cst_10 : f32 to vector<16x1xf32>
    %21 = arith.addf %19, %20 : vector<16x1xf32>
    %22 = math.rsqrt %21 : vector<16x1xf32>
    %23 = vector.broadcast %22 : vector<16x1xf32> to vector<16x32xf32>
    %24 = arith.mulf %14, %23 : vector<16x32xf32>
    %c0_11 = arith.constant 0 : index
    %c0_12 = arith.constant 0 : index
    %25 = vector.load %arg6[%c0_11, %c0_12] : memref<1x32xf32, #tpu.memory_space<vmem>>, vector<1x32xf32>
    %26 = vector.broadcast %25 : vector<1x32xf32> to vector<16x32xf32>
    %27 = arith.mulf %24, %26 : vector<16x32xf32>
    %c0_13 = arith.constant 0 : index
    %c0_14 = arith.constant 0 : index
    %28 = vector.load %arg7[%c0_13, %c0_14] : memref<1x32xf32, #tpu.memory_space<vmem>>, vector<1x32xf32>
    %29 = vector.broadcast %28 : vector<1x32xf32> to vector<16x32xf32>
    %30 = arith.addf %27, %29 : vector<16x32xf32>
    %31 = arith.truncf %30 : vector<16x32xf32> to vector<16x32xbf16>
    %c0_15 = arith.constant 0 : index
    %c0_16 = arith.constant 0 : index
    %32 = vector.load %arg8[%c0_15, %c0_16] : memref<32x128xbf16, #tpu.memory_space<vmem>>, vector<32x128xbf16>
    %cst_17 = arith.constant dense<0.000000e+00> : vector<16x128xf32>
    %33 = tpu.matmul %31, %32, %cst_17 {dimension_numbers = #tpu.dot_dimension_numbers<[1], [0], [0], [1], [0, 0, 1, 1], [], []>} : vector<16x32xbf16>, vector<32x128xbf16>, vector<16x128xf32> -> vector<16x128xf32>
    %c0_18 = arith.constant 0 : index
    %c0_19 = arith.constant 0 : index
    %34 = vector.load %arg9[%c0_18, %c0_19] : memref<1x128xf32, #tpu.memory_space<vmem>>, vector<1x128xf32>
    %35 = vector.broadcast %34 : vector<1x128xf32> to vector<16x128xf32>
    %36 = arith.addf %33, %35 : vector<16x128xf32>
    %c0_20 = arith.constant 0 : index
    %c0_21 = arith.constant 0 : index
    %37 = vector.load %arg2[%c0_20, %c0_21] : memref<16x1xf32, #tpu.memory_space<vmem>>, vector<16x1xf32>
    %cst_22 = arith.constant 0.000000e+00 : f32
    %38 = vector.broadcast %cst_22 : f32 to vector<16x1xf32>
    %39 = arith.cmpf ogt, %37, %38 : vector<16x1xf32>
    %cst_23 = arith.constant -1.000000e+32 : f32
    %40 = vector.shape_cast %39 : vector<16x1xi1> to vector<16x1xi1>
    %41 = vector.broadcast %40 : vector<16x1xi1> to vector<16x128xi1>
    %42 = vector.broadcast %cst_23 : f32 to vector<16x128xf32>
    %43 = arith.select %41, %36, %42 : vector<16x128xi1>, vector<16x128xf32>
    %44 = tpu.iota {dimensions = array<i32: 1>} : vector<16x128xi32>
    %c0_24 = arith.constant 0 : index
    %c0_25 = arith.constant 0 : index
    %45 = vector.load %arg3[%c0_24, %c0_25] : memref<16x1xi32, #tpu.memory_space<vmem>>, vector<16x1xi32>
    %46 = vector.broadcast %45 : vector<16x1xi32> to vector<16x128xi32>
    %47 = arith.cmpi eq, %44, %46 : vector<16x128xi32>
    %cst_26 = arith.constant 0.000000e+00 : f32
    %48 = vector.broadcast %cst_26 : f32 to vector<16x128xf32>
    %49 = arith.select %47, %43, %48 : vector<16x128xi1>, vector<16x128xf32>
    %cst_27 = arith.constant dense<0.000000e+00> : vector<16xf32>
    %50 = vector.multi_reduction <add>, %49, %cst_27 [1] : vector<16x128xf32> to vector<16xf32>
    %51 = vector.shape_cast %50 : vector<16xf32> to vector<16x1xf32>
    %c16_i32 = arith.constant 16 : i32
    %52 = vector.broadcast %c16_i32 : i32 to vector<16x128xi32>
    %53 = arith.cmpi slt, %44, %52 : vector<16x128xi32>
    %cst_28 = arith.constant 0xFF800000 : f32
    %54 = vector.broadcast %cst_28 : f32 to vector<16x128xf32>
    %55 = arith.select %53, %43, %54 : vector<16x128xi1>, vector<16x128xf32>
    %cst_29 = arith.constant dense<0xFF800000> : vector<16xf32>
    %56 = vector.multi_reduction <maximumf>, %55, %cst_29 [1] : vector<16x128xf32> to vector<16xf32>
    %57 = vector.shape_cast %56 : vector<16xf32> to vector<16x1xf32>
    %58 = vector.broadcast %57 : vector<16x1xf32> to vector<16x128xf32>
    %59 = arith.subf %55, %58 : vector<16x128xf32>
    %60 = math.exp %59 : vector<16x128xf32>
    %cst_30 = arith.constant dense<0.000000e+00> : vector<16xf32>
    %61 = vector.multi_reduction <add>, %60, %cst_30 [1] : vector<16x128xf32> to vector<16xf32>
    %62 = vector.shape_cast %61 : vector<16xf32> to vector<16x1xf32>
    %cst_31 = arith.constant 1.000000e+00 : f32
    %63 = vector.broadcast %cst_31 : f32 to vector<16x1xf32>
    %64 = arith.divf %63, %62 : vector<16x1xf32>
    %65 = vector.broadcast %64 : vector<16x1xf32> to vector<16x128xf32>
    %66 = arith.mulf %60, %65 : vector<16x128xf32>
    %c0_32 = arith.constant 0 : index
    %c0_33 = arith.constant 0 : index
    %67 = vector.load %arg10[%c0_32, %c0_33] : memref<16x128xf32, #tpu.memory_space<vmem>>, vector<16x128xf32>
    tpu.vector_store %arg10[%c0_32, %c0_33], %66 {strides = array<i32>} : memref<16x128xf32, #tpu.memory_space<vmem>>, vector<16x128xf32>,
    %68 = math.log %62 : vector<16x1xf32>
    %69 = arith.addf %57, %68 : vector<16x1xf32>
    %c0_i32 = arith.constant 0 : i32
    %70 = vector.broadcast %c0_i32 : i32 to vector<16x1xi32>
    %71 = arith.cmpi ne, %45, %70 : vector<16x1xi32>
    %72 = arith.extui %71 : vector<16x1xi1> to vector<16x1xi32>
    %73 = arith.sitofp %72 : vector<16x1xi32> to vector<16x1xf32>
    %74 = arith.subf %69, %51 : vector<16x1xf32>
    %75 = arith.mulf %74, %73 : vector<16x1xf32>
    %76 = vector.shape_cast %75 : vector<16x1xf32> to vector<1x16x1xf32>
    %cst_34 = arith.constant dense<0.000000e+00> : vector<1xf32>
    %77 = vector.multi_reduction <add>, %76, %cst_34 [1, 2] : vector<1x16x1xf32> to vector<1xf32>
    %78 = vector.shape_cast %77 : vector<1xf32> to vector<1x1x1xf32>
    %79 = vector.extract %78[0, 0, 0] : f32 from vector<1x1x1xf32>
    %80 = vector.shape_cast %73 : vector<16x1xf32> to vector<1x16x1xf32>
    %cst_35 = arith.constant dense<0.000000e+00> : vector<1xf32>
    %81 = vector.multi_reduction <add>, %80, %cst_35 [1, 2] : vector<1x16x1xf32> to vector<1xf32>
    %82 = vector.shape_cast %81 : vector<1xf32> to vector<1x1x1xf32>
    %83 = vector.extract %82[0, 0, 0] : f32 from vector<1x1x1xf32>
    %84 = tpu.iota {dimensions = array<i32: 1>} : vector<1x8x128xi32>
    %85 = tpu.iota {dimensions = array<i32: 2>} : vector<1x8x128xi32>
    %c0_i32_36 = arith.constant 0 : i32
    %86 = vector.broadcast %c0_i32_36 : i32 to vector<1x8x128xi32>
    %87 = arith.cmpi eq, %84, %86 : vector<1x8x128xi32>
    %c0_i32_37 = arith.constant 0 : i32
    %88 = vector.broadcast %c0_i32_37 : i32 to vector<1x8x128xi32>
    %89 = arith.cmpi eq, %85, %88 : vector<1x8x128xi32>
    %90 = arith.andi %87, %89 : vector<1x8x128xi1>
    %c0_i32_38 = arith.constant 0 : i32
    %91 = vector.broadcast %c0_i32_38 : i32 to vector<1x8x128xi32>
    %92 = arith.cmpi eq, %84, %91 : vector<1x8x128xi32>
    %c1_i32 = arith.constant 1 : i32
    %93 = vector.broadcast %c1_i32 : i32 to vector<1x8x128xi32>
    %94 = arith.cmpi eq, %85, %93 : vector<1x8x128xi32>
    %95 = arith.andi %92, %94 : vector<1x8x128xi1>
    %cst_39 = arith.constant 0.000000e+00 : f32
    %96 = vector.broadcast %83 : f32 to vector<1x8x128xf32>
    %97 = vector.broadcast %cst_39 : f32 to vector<1x8x128xf32>
    %98 = arith.select %95, %96, %97 : vector<1x8x128xi1>, vector<1x8x128xf32>
    %99 = vector.broadcast %79 : f32 to vector<1x8x128xf32>
    %100 = arith.select %90, %99, %98 : vector<1x8x128xi1>, vector<1x8x128xf32>
    %c0_40 = arith.constant 0 : index
    %c0_41 = arith.constant 0 : index
    %c0_42 = arith.constant 0 : index
    %101 = vector.load %arg11[%c0_40, %c0_41, %c0_42] : memref<1x8x128xf32, #tpu.memory_space<vmem>>, vector<1x8x128xf32>
    tpu.vector_store %arg11[%c0_40, %c0_41, %c0_42], %100 {strides = array<i32>} : memref<1x8x128xf32, #tpu.memory_space<vmem>>, vector<1x8x128xf32>,
    return
  }
  func.func @transform_0(%arg0: i32) -> (i32, i32) {
    %c0_i32 = arith.constant 0 : i32
    %c0_i32_0 = arith.constant 0 : i32
    return %arg0, %c0_i32 : i32, i32
  }
  func.func @transform_1(%arg0: i32) -> (i32, i32) {
    %c0_i32 = arith.constant 0 : i32
    %c0_i32_0 = arith.constant 0 : i32
    return %arg0, %c0_i32 : i32, i32
  }
  func.func @transform_2(%arg0: i32) -> (i32, i32) {
    %c0_i32 = arith.constant 0 : i32
    %c0_i32_0 = arith.constant 0 : i32
    return %arg0, %c0_i32 : i32, i32
  }
  func.func @transform_3(%arg0: i32) -> (i32, i32) {
    %c0_i32 = arith.constant 0 : i32
    %c0_i32_0 = arith.constant 0 : i32
    %c0_i32_1 = arith.constant 0 : i32
    return %c0_i32, %c0_i32_0 : i32, i32
  }
  func.func @transform_4(%arg0: i32) -> (i32, i32) {
    %c0_i32 = arith.constant 0 : i32
    %c0_i32_0 = arith.constant 0 : i32
    %c0_i32_1 = arith.constant 0 : i32
    return %c0_i32, %c0_i32_0 : i32, i32
  }
  func.func @transform_5(%arg0: i32) -> (i32, i32) {
    %c0_i32 = arith.constant 0 : i32
    %c0_i32_0 = arith.constant 0 : i32
    %c0_i32_1 = arith.constant 0 : i32
    return %c0_i32, %c0_i32_0 : i32, i32
  }
  func.func @transform_6(%arg0: i32) -> (i32, i32) {
    %c0_i32 = arith.constant 0 : i32
    %c0_i32_0 = arith.constant 0 : i32
    %c0_i32_1 = arith.constant 0 : i32
    return %c0_i32, %c0_i32_0 : i32, i32
  }
  func.func @transform_7(%arg0: i32) -> (i32, i32) {
    %c0_i32 = arith.constant 0 : i32
    %c0_i32_0 = arith.constant 0 : i32
    %c0_i32_1 = arith.constant 0 : i32
    return %c0_i32, %c0_i32_0 : i32, i32
  }
  func.func @transform_8(%arg0: i32) -> (i32, i32) {
    %c0_i32 = arith.constant 0 : i32
    %c0_i32_0 = arith.constant 0 : i32
    %c0_i32_1 = arith.constant 0 : i32
    return %c0_i32, %c0_i32_0 : i32, i32
  }
  func.func @transform_9(%arg0: i32) -> (i32, i32) {
    %c0_i32 = arith.constant 0 : i32
    %c0_i32_0 = arith.constant 0 : i32
    return %arg0, %c0_i32 : i32, i32
  }
  func.func @transform_10(%arg0: i32) -> (i32, i32, i32) {
    %c0_i32 = arith.constant 0 : i32
    %c0_i32_0 = arith.constant 0 : i32
    %c0_i32_1 = arith.constant 0 : i32
    return %arg0, %c0_i32, %c0_i32_0 : i32, i32, i32
  }
}

</mosaic_0001>

<llo_original>
// kernel: tpu_custom_call.1
$region0: #{tpu_custom_call.1}
  #allocation0 [shape = 'u32[]', space=smem, size = 0x4, offset = 0x4, fixed_abs, tag = 'smem constant byte address 0x4 - core index']
  #allocation1 [shape = 'u32[144,128]{1,0:T(1,128)}', space=vmem, size = 0x12000, scoped, tag = 'internal scratch']
  %s0 = inlined_call_operand.vmem [shape: f32[16,32], index: 0, kind: input, shape index: {}]
  %s1 = inlined_call_operand.vmem [shape: f32[16,1], index: 1, kind: input, shape index: {}]
  %s2 = inlined_call_operand.vmem [shape: s32[16,1], index: 2, kind: input, shape index: {}]
  %s3 = inlined_call_operand.vmem [shape: bf16[32,32], index: 3, kind: input, shape index: {}]
  %s4 = inlined_call_operand.vmem [shape: f32[1,32], index: 4, kind: input, shape index: {}]
  %s5 = inlined_call_operand.vmem [shape: f32[1,32], index: 5, kind: input, shape index: {}]
  %s6 = inlined_call_operand.vmem [shape: f32[1,32], index: 6, kind: input, shape index: {}]
  %s7 = inlined_call_operand.vmem [shape: bf16[32,128], index: 7, kind: input, shape index: {}]
  %s8 = inlined_call_operand.vmem [shape: f32[1,128], index: 8, kind: input, shape index: {}]
  %s9 = inlined_call_operand.hbm [shape: f32[16,128], index: 9, kind: output, shape index: {0}]
  %s10 = inlined_call_operand.hbm [shape: f32[1,8,128], index: 10, kind: output, shape index: {1}]
  %11 = xla_tuple %s9, %s10
  %s12 = sld [smem:[#allocation0]]
  $region54: #{tpu_custom_call.1} parent=0
    _
  %s14 = ssub.s32 1, %s12
  %s15 = scalar_select 0, %s14, %s12
  $region1: #{tpu_custom_call.1} parent=0
    #allocation2 [shape = 'u8[8192]{0}', space=vmem, size = 0x2000, scoped, tag = 'output window, operand 0, single buffered']
    #allocation3 [shape = 's32[1]{0}', space=sflag, size = 0x4, scoped, tag = 'scoped memory for tpu_custom_call.1']
    #allocation4 [shape = 'u8[4096]{0}', space=vmem, size = 0x1000, scoped, tag = 'output window, operand 1, single buffered']
    #allocation5 [shape = 's32[1]{0}', space=sflag, size = 0x4, scoped, tag = 'scoped memory for tpu_custom_call.1']
    %16 = vsyncpa [#allocation3], 0
    %17 = vsyncpa [#allocation5], 0
    // Predicated region
    $region2: #{tpu_custom_call.1} parent=1 // pred_check
      _
    $region3: #{tpu_custom_call.1} parent=1 // pred_check_branch
      %19 = sbr.rel (0) target = $region5
    $region4: #{tpu_custom_call.1} parent=1 // pred_region
      _
    $region5: #{tpu_custom_call.1} parent=1 // pred_fallthru
      _
    // Predicated region
    $region6: #{tpu_custom_call.1} parent=1 // pred_check
      _
    $region7: #{tpu_custom_call.1} parent=1 // pred_check_branch
      %21 = sbr.rel (0) target = $region9
    $region8: #{tpu_custom_call.1} parent=1 // pred_region
      _
    $region9: #{tpu_custom_call.1} parent=1 // pred_fallthru
      _
    // Predicated region
    $region10: #{tpu_custom_call.1} parent=1 // pred_check
      _
    $region11: #{tpu_custom_call.1} parent=1 // pred_check_branch
      %23 = sbr.rel (0) target = $region13
    $region12: #{tpu_custom_call.1} parent=1 // pred_region
      _
    $region13: #{tpu_custom_call.1} parent=1 // pred_fallthru
      _
    // Predicated region
    $region14: #{tpu_custom_call.1} parent=1 // pred_check
      _
    $region15: #{tpu_custom_call.1} parent=1 // pred_check_branch
      %25 = sbr.rel (0) target = $region17
    $region16: #{tpu_custom_call.1} parent=1 // pred_region
      _
    $region17: #{tpu_custom_call.1} parent=1 // pred_fallthru
      _
    // Predicated region
    $region18: #{tpu_custom_call.1} parent=1 // pred_check
      _
    $region19: #{tpu_custom_call.1} parent=1 // pred_check_branch
      %27 = sbr.rel (0) target = $region21
    $region20: #{tpu_custom_call.1} parent=1 // pred_region
      _
    $region21: #{tpu_custom_call.1} parent=1 // pred_fallthru
      _
    // Predicated region
    $region22: #{tpu_custom_call.1} parent=1 // pred_check
      _
    $region23: #{tpu_custom_call.1} parent=1 // pred_check_branch
      %29 = sbr.rel (0) target = $region25
    $region24: #{tpu_custom_call.1} parent=1 // pred_region
      _
    $region25: #{tpu_custom_call.1} parent=1 // pred_fallthru
      _
    // Predicated region
    $region26: #{tpu_custom_call.1} parent=1 // pred_check
      _
    $region27: #{tpu_custom_call.1} parent=1 // pred_check_branch
      %31 = sbr.rel (0) target = $region29
    $region28: #{tpu_custom_call.1} parent=1 // pred_region
      _
    $region29: #{tpu_custom_call.1} parent=1 // pred_fallthru
      _
    // Predicated region
    $region30: #{tpu_custom_call.1} parent=1 // pred_check
      _
    $region31: #{tpu_custom_call.1} parent=1 // pred_check_branch
      %33 = sbr.rel (0) target = $region33
    $region32: #{tpu_custom_call.1} parent=1 // pred_region
      _
    $region33: #{tpu_custom_call.1} parent=1 // pred_fallthru
      _
    // Predicated region
    $region34: #{tpu_custom_call.1} parent=1 // pred_check
      _
    $region35: #{tpu_custom_call.1} parent=1 // pred_check_branch
      %35 = sbr.rel (0) target = $region37
    $region36: #{tpu_custom_call.1} parent=1 // pred_region
      _
    $region37: #{tpu_custom_call.1} parent=1 // pred_fallthru
      _
    %v37 = vld [vmem:[%s0] sm:$0xff]
    %v38 = vld [vmem:[%s0 + $0x8] sm:$0xff]
    %v39 = vpack.c.bf16 %v38, %v37
    %v40 = vld [vmem:[%s3] sm:$0xf]
    %v41 = vld [vmem:[%s3 + $0x4] sm:$0xf]
    %v42 = vld [vmem:[%s3 + $0x8] sm:$0xf]
    %v43 = vld [vmem:[%s3 + $0xc] sm:$0xf]
    %v44 = vld [vmem:[%s4] sm:$0x1]
    %v46 = vlaneseq
    %v47 = vshrl.u32 %v46, 7
    %v48 = vsub.s32 0, %v47
    %v49 = vrot.slane %v44, %v48
    %v55 = vunpack.c.l.b16 %v40
    %v56 = vunpack.c.l.b16 %v41
    %v57 = vunpack.c.l.b16 %v42
    %v58 = vunpack.c.l.b16 %v43
    %v59 = vpack.c.b16 %v56, %v55
    %v60 = vpack.c.b16 %v58, %v57
    %vm63 = vcmask 261120
    %v65 = vsel %vm63, %v39, 0
    %67 = vmatprep.subr.bf16.mxu0 0
    %68 = vmatpush1.bf16.msra.mxu0 %v59
    %69 = vmatprep.subr.bf16.mxu0 0
    %70 = vmatpush1.bf16.msra.mxu0 %v60
    %71 = vmatprep.subr.bf16.mxu0 0
    %72 = vmatpush1.bf16.msra.mxu0 0
    %73 = vmatprep.subr.bf16.mxu0 0
    %74 = vmatpush1.bf16.msra.mxu0 0
    %75 = vmatprep.subr.bf16.mxu0 0
    %76 = vmatpush1.bf16.msra.mxu0 0
    %77 = vmatprep.subr.bf16.mxu0 0
    %78 = vmatpush1.bf16.msra.mxu0 0
    %79 = vmatprep.subr.bf16.mxu0 0
    %80 = vmatpush1.bf16.msra.mxu0 0
    %81 = vmatprep.subr.bf16.mxu0 0
    %82 = vmatpush1.bf16.msra.mxu0 0
    %83 = vmatprep.subr.bf16.mxu0 0
    %84 = vmatpush1.bf16.msra.mxu0 0
    %85 = vmatprep.subr.bf16.mxu0 0
    %86 = vmatpush1.bf16.msra.mxu0 0
    %87 = vmatprep.subr.bf16.mxu0 0
    %88 = vmatpush1.bf16.msra.mxu0 0
    %89 = vmatprep.subr.bf16.mxu0 0
    %90 = vmatpush1.bf16.msra.mxu0 0
    %91 = vmatprep.subr.bf16.mxu0 0
    %92 = vmatpush1.bf16.msra.mxu0 0
    %93 = vmatprep.subr.bf16.mxu0 0
    %94 = vmatpush1.bf16.msra.mxu0 0
    %95 = vmatprep.subr.bf16.mxu0 0
    %96 = vmatpush1.bf16.msra.mxu0 0
    %97 = vmatprep.subr.bf16.mxu0 0
    %98 = vmatpush1.bf16.msra.mxu0 0
    %99 = vmatprep.mubr.bf16.mxu0 0
    %100 = vmatmul.mubr.bf16.gmra.mrb[0].mxu0 %v65
    %v101 = vpop.f32.mrb[0].mxu0
    %v102 = vadd.f32 %v49, %v101
    %v103 = vpop.f32.mrb[0].mxu0
    %v104 = vpop.f32.mrb[0].mxu0
    %v105 = vadd.f32 %v49, %v104
    %v106 = vpop.f32.mrb[0].mxu0
    %107 = vdwg.mxu0
    %v108 = vmax.f32 %v102, 0.0
    %v109 = vmax.f32 %v105, 0.0
    %v110 = vsel %vm63, %v108, 0.0
    %111 = vadd.xlane.f32.xlu0 %v110
    %v112 = vpop.xlane.xlu0 %111
    %v113 = vsel %vm63, %v109, 0.0
    %114 = vadd.xlane.f32.xlu0 %v113
    %v115 = vpop.xlane.xlu0 %114
    %v116 = vrcp.pop 32.0
    %v117 = vmul.f32 %v112, %v116
    %v118 = vmul.f32 %v115, %v116
    %v119 = vsub.f32 %v108, %v117
    %v120 = vsub.f32 %v109, %v118
    %v121 = vmul.f32 %v119, %v119
    %v122 = vmul.f32 %v120, %v120
    %v123 = vsel %vm63, %v121, 0.0
    %124 = vadd.xlane.f32.xlu0 %v123
    %v125 = vpop.xlane.xlu0 %124
    %v126 = vsel %vm63, %v122, 0.0
    %127 = vadd.xlane.f32.xlu0 %v126
    %v128 = vpop.xlane.xlu0 %127
    %v129 = vmul.f32 %v125, %v116
    %v130 = vmul.f32 %v128, %v116
    %v131 = vadd.f32 %v129, 1e-05
    %v132 = vadd.f32 %v130, 1e-05
    %v133 = vrsqrt.pop %v131
    %v134 = vrsqrt.pop %v132
    %v135 = vmul.f32 %v119, %v133
    %v136 = vmul.f32 %v120, %v134
    %v137 = vld [vmem:[%s5] sm:$0x1]
    %v139 = vlaneseq
    %v140 = vshrl.u32 %v139, 7
    %v141 = vsub.s32 0, %v140
    %v142 = vrot.slane %v137, %v141
    %v144 = vmul.f32 %v135, %v142
    %v145 = vmul.f32 %v136, %v142
    %v146 = vld [vmem:[%s6] sm:$0x1]
    %v148 = vlaneseq
    %v149 = vshrl.u32 %v148, 7
    %v150 = vsub.s32 0, %v149
    %v151 = vrot.slane %v146, %v150
    %v153 = vadd.f32 %v144, %v151
    %v154 = vadd.f32 %v145, %v151
    %v155 = vpack.c.bf16 %v154, %v153
    %v156 = vld [vmem:[%s7] sm:$0xf]
    %v157 = vld [vmem:[%s7 + $0x4] sm:$0xf]
    %v158 = vld [vmem:[%s7 + $0x8] sm:$0xf]
    %v159 = vld [vmem:[%s7 + $0xc] sm:$0xf]
    %v160 = vld [vmem:[%s8] sm:$0x1]
    %v162 = vlaneseq
    %v163 = vshrl.u32 %v162, 7
    %v164 = vsub.s32 0, %v163
    %v165 = vrot.slane %v160, %v164
    %v171 = vunpack.c.l.b16 %v156
    %v172 = vunpack.c.l.b16 %v157
    %v173 = vunpack.c.l.b16 %v158
    %v174 = vunpack.c.l.b16 %v159
    %v175 = vpack.c.b16 %v172, %v171
    %v176 = vpack.c.b16 %v174, %v173
    %v180 = vsel %vm63, %v155, 0
    %182 = vmatprep.subr.bf16.mxu0 0
    %183 = vmatpush1.bf16.msra.mxu0 %v175
    %184 = vmatprep.subr.bf16.mxu0 0
    %185 = vmatpush1.bf16.msra.mxu0 %v176
    %186 = vmatprep.subr.bf16.mxu0 0
    %187 = vmatpush1.bf16.msra.mxu0 0
    %188 = vmatprep.subr.bf16.mxu0 0
    %189 = vmatpush1.bf16.msra.mxu0 0
    %190 = vmatprep.subr.bf16.mxu0 0
    %191 = vmatpush1.bf16.msra.mxu0 0
    %192 = vmatprep.subr.bf16.mxu0 0
    %193 = vmatpush1.bf16.msra.mxu0 0
    %194 = vmatprep.subr.bf16.mxu0 0
    %195 = vmatpush1.bf16.msra.mxu0 0
    %196 = vmatprep.subr.bf16.mxu0 0
    %197 = vmatpush1.bf16.msra.mxu0 0
    %198 = vmatprep.subr.bf16.mxu0 0
    %199 = vmatpush1.bf16.msra.mxu0 0
    %200 = vmatprep.subr.bf16.mxu0 0
    %201 = vmatpush1.bf16.msra.mxu0 0
    %202 = vmatprep.subr.bf16.mxu0 0
    %203 = vmatpush1.bf16.msra.mxu0 0
    %204 = vmatprep.subr.bf16.mxu0 0
    %205 = vmatpush1.bf16.msra.mxu0 0
    %206 = vmatprep.subr.bf16.mxu0 0
    %207 = vmatpush1.bf16.msra.mxu0 0
    %208 = vmatprep.subr.bf16.mxu0 0
    %209 = vmatpush1.bf16.msra.mxu0 0
    %210 = vmatprep.subr.bf16.mxu0 0
    %211 = vmatpush1.bf16.msra.mxu0 0
    %212 = vmatprep.subr.bf16.mxu0 0
    %213 = vmatpush1.bf16.msra.mxu0 0
    %214 = vmatprep.mubr.bf16.mxu0 0
    %215 = vmatmul.mubr.bf16.gmra.mrb[0].mxu0 %v180
    %v216 = vpop.f32.mrb[0].mxu0
    %v217 = vadd.f32 %v165, %v216
    %v218 = vpop.f32.mrb[0].mxu0
    %v219 = vpop.f32.mrb[0].mxu0
    %v220 = vadd.f32 %v165, %v219
    %v221 = vpop.f32.mrb[0].mxu0
    %222 = vdwg.mxu0
    %v223 = vld [vmem:[%s1] sm:$0xff]
    %v224 = vld [vmem:[%s1 + $0x8] sm:$0xff]
    %vm225 = vcmp.gt.f32.partialorder %v223, 0.0
    %vm226 = vcmp.gt.f32.partialorder %v224, 0.0
    %v227 = vsel %vm225, 1, 0
    %v228 = vsel %vm226, 1, 0
    %229 = vset.pattern.permute.xlu0 0
    %230 = vperm.xlu0 %229, %v227
    %v231 = vpop.permute.xlu0 %230
    %232 = vset.pattern.permute.xlu0 0
    %233 = vperm.xlu0 %232, %v228
    %v234 = vpop.permute.xlu0 %233
    %vm235 = vcmp.eq.s32.totalorder %v231, 1
    %vm236 = vcmp.eq.s32.totalorder %v234, 1
    %v237 = vsel %vm235, %v217, -1e+32
    %v238 = vsel %vm236, %v220, -1e+32
    %v239 = vlaneseq
    %v240 = vand.u32 %v239, 127
    %v241 = vld [vmem:[%s2] sm:$0xff]
    %v242 = vld [vmem:[%s2 + $0x8] sm:$0xff]
    %243 = vset.pattern.permute.xlu0 0
    %244 = vperm.xlu0 %243, %v241
    %v245 = vpop.permute.xlu0 %244
    %246 = vset.pattern.permute.xlu0 0
    %247 = vperm.xlu0 %246, %v242
    %v248 = vpop.permute.xlu0 %247
    %vm249 = vcmp.eq.s32.totalorder %v240, %v245
    %vm250 = vcmp.eq.s32.totalorder %v240, %v248
    %v251 = vsel %vm249, %v237, 0.0
    %v252 = vsel %vm250, %v238, 0.0
    %253 = vadd.xlane.f32.xlu0 %v251
    %v254 = vpop.xlane.xlu0 %253
    %255 = vadd.xlane.f32.xlu0 %v252
    %v256 = vpop.xlane.xlu0 %255
    %vm257 = vcmp.lt.s32.totalorder %v240, 16
    %v258 = vsel %vm257, %v237, -inf
    %v259 = vsel %vm257, %v238, -inf
    %260 = vmax.xlane.f32.xlu0 %v258
    %v261 = vpop.xlane.xlu0 %260
    %262 = vmax.xlane.f32.xlu0 %v259
    %v263 = vpop.xlane.xlu0 %262
    %v264 = vsub.f32 %v258, %v261
    %v265 = vsub.f32 %v259, %v263
    %v266 = vmul.f32 %v264, 1.442695
    %v267 = vpow.pop %v266
    %v268 = vmul.f32 %v265, 1.442695
    %v269 = vpow.pop %v268
    %270 = vadd.xlane.f32.xlu0 %v267
    %v271 = vpop.xlane.xlu0 %270
    %272 = vadd.xlane.f32.xlu0 %v269
    %v273 = vpop.xlane.xlu0 %272
    %v274 = vrcp.pop %v271
    %v275 = vmul.f32 1.0, %v274
    %v276 = vrcp.pop %v273
    %v277 = vmul.f32 1.0, %v276
    %v278 = vmul.f32 %v267, %v275
    %v279 = vmul.f32 %v269, %v277
    %280 = vst [vmem:[#allocation2] sm:$0xff] %v278
    %281 = vst [vmem:[#allocation2 + $0x8] sm:$0xff] %v279
    %v282 = vlog2.pop %v271
    %v283 = vmul.f32 %v282, 0.6931472
    %v284 = vlog2.pop %v273
    %v285 = vmul.f32 %v284, 0.6931472
    %v286 = vadd.f32 %v261, %v283
    %v287 = vadd.f32 %v263, %v285
    %vm288 = vcmp.ne.s32.totalorder %v241, 0
    %vm289 = vcmp.ne.s32.totalorder %v242, 0
    %v290 = vsel %vm288, 1, 0
    %v291 = vsel %vm289, 1, 0
    %v292 = vcvt.s32.f32 %v290
    %v293 = vcvt.s32.f32 %v291
    %v294 = vsub.f32 %v286, %v254
    %v295 = vsub.f32 %v287, %v256
    %v296 = vmul.f32 %v294, %v292
    %v297 = vmul.f32 %v295, %v293
    %vm298 = vcmask 7168
    %v299 = vsel %vm298, %v296, 0.0
    %v300 = vsel %vm298, %v297, 0.0
    %v301 = vadd.f32 %v299, %v300
    %302 = vadd.xlane.f32.xlu0 %v301
    %v303 = vpop.xlane.xlu0 %302
    %v304 = vrot.slane %v303, 4
    %v305 = vadd.f32 %v303, %v304
    %v306 = vrot.slane %v305, 2
    %v307 = vadd.f32 %v305, %v306
    %v308 = vrot.slane %v307, 1
    %v309 = vadd.f32 %v307, %v308
    %s310 = vtos %v309
    %v311 = vsel %vm298, %v292, 0.0
    %v312 = vsel %vm298, %v293, 0.0
    %v313 = vadd.f32 %v311, %v312
    %314 = vadd.xlane.f32.xlu0 %v313
    %v315 = vpop.xlane.xlu0 %314
    %v316 = vrot.slane %v315, 4
    %v317 = vadd.f32 %v315, %v316
    %v318 = vrot.slane %v317, 2
    %v319 = vadd.f32 %v317, %v318
    %v320 = vrot.slane %v319, 1
    %v321 = vadd.f32 %v319, %v320
    %s322 = vtos %v321
    %v323 = vlaneseq
    %v324 = vshrl.u32 %v323, 7
    %vm325 = vcmp.eq.s32.totalorder %v324, 0
    %vm326 = vcmp.eq.s32.totalorder %v240, 0
    %vm327 = vmand %vm325, %vm326
    %vm328 = vcmp.eq.s32.totalorder %v240, 1
    %vm329 = vmand %vm325, %vm328
    %v330 = vstv %s322
    %v331 = vsel %vm329, %v330, 0.0
    %v332 = vstv %s310
    %v333 = vsel %vm327, %v332, %v331
    %334 = vst [vmem:[#allocation4] sm:$0xff] %v333
    // Predicated region
    $region38: #{tpu_custom_call.1} parent=1 // pred_check
      _
    $region39: #{tpu_custom_call.1} parent=1 // pred_check_branch
      %336 = sbr.rel (0) target = $region41
    $region40: #{tpu_custom_call.1} parent=1 // pred_region
      %s338 = ssub.s32 256, 256
      %339 = vsyncadd [#allocation3], %s338
      %s340 = sshll.u32 [#allocation2], 4
      %s341 = int_to_ptr.vmem [resolvable:$true] %s340
      %346 = dma.vmem_to_hbm [thread:$0]  %s341, 256, %s9, [#allocation3], 128, 128, 8
    $region41: #{tpu_custom_call.1} parent=1 // pred_fallthru
      _
    // Predicated region
    $region42: #{tpu_custom_call.1} parent=1 // pred_check
      _
    $region43: #{tpu_custom_call.1} parent=1 // pred_check_branch
      %348 = sbr.rel (0) target = $region45
    $region44: #{tpu_custom_call.1} parent=1 // pred_region
      %s350 = ssub.s32 128, 128
      %351 = vsyncadd [#allocation5], %s350
      %s353 = sshll.u32 [#allocation4], 4
      %s354 = int_to_ptr.vmem [resolvable:$true] %s353
      %356 = dma.vmem_to_hbm [thread:$0]  %s354, 128, %s10, [#allocation5]
    $region45: #{tpu_custom_call.1} parent=1 // pred_fallthru
      _
    // Predicated region
    $region46: #{tpu_custom_call.1} parent=1 // pred_check
      _
    $region47: #{tpu_custom_call.1} parent=1 // pred_check_branch
      %358 = sbr.rel (0) target = $region49
    $region48: #{tpu_custom_call.1} parent=1 // pred_region
      %359 = dma.done [#allocation3], 256
    $region49: #{tpu_custom_call.1} parent=1 // pred_fallthru
      _
    // Predicated region
    $region50: #{tpu_custom_call.1} parent=1 // pred_check
      _
    $region51: #{tpu_custom_call.1} parent=1 // pred_check_branch
      %361 = sbr.rel (0) target = $region53
    $region52: #{tpu_custom_call.1} parent=1 // pred_region
      %362 = dma.done [#allocation5], 128
    $region53: #{tpu_custom_call.1} parent=1 // pred_fallthru
      _
    %363 = vsyncpa [#allocation3], 1
    %364 = vsyncpa [#allocation5], 1

// kernel: tpu_custom_call.1
$region0: #{tpu_custom_call.1}
  #allocation0 [shape = 'u32[]', space=smem, size = 0x4, offset = 0x4, fixed_abs, tag = 'smem constant byte address 0x4 - core index']
  #allocation1 [shape = 'u32[144,128]{1,0:T(1,128)}', space=vmem, size = 0x12000, scoped, tag = 'internal scratch']
  %s0 = inlined_call_operand.vmem [shape: f32[16,32], index: 0, kind: input, shape index: {}]
  %s1 = inlined_call_operand.vmem [shape: f32[16,1], index: 1, kind: input, shape index: {}]
  %s2 = inlined_call_operand.vmem [shape: s32[16,1], index: 2, kind: input, shape index: {}]
  %s3 = inlined_call_operand.vmem [shape: bf16[32,32], index: 3, kind: input, shape index: {}]
  %s4 = inlined_call_operand.vmem [shape: f32[1,32], index: 4, kind: input, shape index: {}]
  %s5 = inlined_call_operand.vmem [shape: f32[1,32], index: 5, kind: input, shape index: {}]
  %s6 = inlined_call_operand.vmem [shape: f32[1,32], index: 6, kind: input, shape index: {}]
  %s7 = inlined_call_operand.vmem [shape: bf16[32,128], index: 7, kind: input, shape index: {}]
  %s8 = inlined_call_operand.vmem [shape: f32[1,128], index: 8, kind: input, shape index: {}]
  %s9 = inlined_call_operand.hbm [shape: f32[16,128], index: 9, kind: output, shape index: {0}]
  %s10 = inlined_call_operand.hbm [shape: f32[1,8,128], index: 10, kind: output, shape index: {1}]
  %11 = xla_tuple %s9, %s10
  %s12 = sld [smem:[#allocation0]]
  $region54: #{tpu_custom_call.1} parent=0
    _
  %s14 = ssub.s32 1, %s12
  %s15 = scalar_select 0, %s14, %s12
  $region1: #{tpu_custom_call.1} parent=0
    #allocation2 [shape = 'u8[8192]{0}', space=vmem, size = 0x2000, scoped, tag = 'output window, operand 0, single buffered']
    #allocation3 [shape = 's32[1]{0}', space=sflag, size = 0x4, scoped, tag = 'scoped memory for tpu_custom_call.1']
    #allocation4 [shape = 'u8[4096]{0}', space=vmem, size = 0x1000, scoped, tag = 'output window, operand 1, single buffered']
    #allocation5 [shape = 's32[1]{0}', space=sflag, size = 0x4, scoped, tag = 'scoped memory for tpu_custom_call.1']
    %16 = vsyncpa [#allocation3], 0
    %17 = vsyncpa [#allocation5], 0
    // Predicated region
    $region2: #{tpu_custom_call.1} parent=1 // pred_check
      _
    $region3: #{tpu_custom_call.1} parent=1 // pred_check_branch
      %19 = sbr.rel (0) target = $region5
    $region4: #{tpu_custom_call.1} parent=1 // pred_region
      _
    $region5: #{tpu_custom_call.1} parent=1 // pred_fallthru
      _
    // Predicated region
    $region6: #{tpu_custom_call.1} parent=1 // pred_check
      _
    $region7: #{tpu_custom_call.1} parent=1 // pred_check_branch
      %21 = sbr.rel (0) target = $region9
    $region8: #{tpu_custom_call.1} parent=1 // pred_region
      _
    $region9: #{tpu_custom_call.1} parent=1 // pred_fallthru
      _
    // Predicated region
    $region10: #{tpu_custom_call.1} parent=1 // pred_check
      _
    $region11: #{tpu_custom_call.1} parent=1 // pred_check_branch
      %23 = sbr.rel (0) target = $region13
    $region12: #{tpu_custom_call.1} parent=1 // pred_region
      _
    $region13: #{tpu_custom_call.1} parent=1 // pred_fallthru
      _
    // Predicated region
    $region14: #{tpu_custom_call.1} parent=1 // pred_check
      _
    $region15: #{tpu_custom_call.1} parent=1 // pred_check_branch
      %25 = sbr.rel (0) target = $region17
    $region16: #{tpu_custom_call.1} parent=1 // pred_region
      _
    $region17: #{tpu_custom_call.1} parent=1 // pred_fallthru
      _
    // Predicated region
    $region18: #{tpu_custom_call.1} parent=1 // pred_check
      _
    $region19: #{tpu_custom_call.1} parent=1 // pred_check_branch
      %27 = sbr.rel (0) target = $region21
    $region20: #{tpu_custom_call.1} parent=1 // pred_region
      _
    $region21: #{tpu_custom_call.1} parent=1 // pred_fallthru
      _
    // Predicated region
    $region22: #{tpu_custom_call.1} parent=1 // pred_check
      _
    $region23: #{tpu_custom_call.1} parent=1 // pred_check_branch
      %29 = sbr.rel (0) target = $region25
    $region24: #{tpu_custom_call.1} parent=1 // pred_region
      _
    $region25: #{tpu_custom_call.1} parent=1 // pred_fallthru
      _
    // Predicated region
    $region26: #{tpu_custom_call.1} parent=1 // pred_check
      _
    $region27: #{tpu_custom_call.1} parent=1 // pred_check_branch
      %31 = sbr.rel (0) target = $region29
    $region28: #{tpu_custom_call.1} parent=1 // pred_region
      _
    $region29: #{tpu_custom_call.1} parent=1 // pred_fallthru
      _
    // Predicated region
    $region30: #{tpu_custom_call.1} parent=1 // pred_check
      _
    $region31: #{tpu_custom_call.1} parent=1 // pred_check_branch
      %33 = sbr.rel (0) target = $region33
    $region32: #{tpu_custom_call.1} parent=1 // pred_region
      _
    $region33: #{tpu_custom_call.1} parent=1 // pred_fallthru
      _
    // Predicated region
    $region34: #{tpu_custom_call.1} parent=1 // pred_check
      _
    $region35: #{tpu_custom_call.1} parent=1 // pred_check_branch
      %35 = sbr.rel (0) target = $region37
    $region36: #{tpu_custom_call.1} parent=1 // pred_region
      _
    $region37: #{tpu_custom_call.1} parent=1 // pred_fallthru
      _
    %v37 = vld [vmem:[%s0] sm:$0xff]
    %v38 = vld [vmem:[%s0 + $0x8] sm:$0xff]
    %v39 = vpack.c.bf16 %v38, %v37
    %v40 = vld [vmem:[%s3] sm:$0xf]
    %v41 = vld [vmem:[%s3 + $0x4] sm:$0xf]
    %v42 = vld [vmem:[%s3 + $0x8] sm:$0xf]
    %v43 = vld [vmem:[%s3 + $0xc] sm:$0xf]
    %v44 = vld [vmem:[%s4] sm:$0x1]
    %v46 = vlaneseq
    %v47 = vshrl.u32 %v46, 7
    %v48 = vsub.s32 0, %v47
    %v49 = vrot.slane %v44, %v48
    %v55 = vunpack.c.l.b16 %v40
    %v56 = vunpack.c.l.b16 %v41
    %v57 = vunpack.c.l.b16 %v42
    %v58 = vunpack.c.l.b16 %v43
    %v59 = vpack.c.b16 %v56, %v55
    %v60 = vpack.c.b16 %v58, %v57
    %vm63 = vcmask 261120
    %v65 = vsel %vm63, %v39, 0
    %67 = vmatprep.subr.bf16.mxu0 0
    %68 = vmatpush1.bf16.msra.mxu0 %v59
    %69 = vmatprep.subr.bf16.mxu0 0
    %70 = vmatpush1.bf16.msra.mxu0 %v60
    %71 = vmatprep.subr.bf16.mxu0 0
    %72 = vmatpush1.bf16.msra.mxu0 0
    %73 = vmatprep.subr.bf16.mxu0 0
    %74 = vmatpush1.bf16.msra.mxu0 0
    %75 = vmatprep.subr.bf16.mxu0 0
    %76 = vmatpush1.bf16.msra.mxu0 0
    %77 = vmatprep.subr.bf16.mxu0 0
    %78 = vmatpush1.bf16.msra.mxu0 0
    %79 = vmatprep.subr.bf16.mxu0 0
    %80 = vmatpush1.bf16.msra.mxu0 0
    %81 = vmatprep.subr.bf16.mxu0 0
    %82 = vmatpush1.bf16.msra.mxu0 0
    %83 = vmatprep.subr.bf16.mxu0 0
    %84 = vmatpush1.bf16.msra.mxu0 0
    %85 = vmatprep.subr.bf16.mxu0 0
    %86 = vmatpush1.bf16.msra.mxu0 0
    %87 = vmatprep.subr.bf16.mxu0 0
    %88 = vmatpush1.bf16.msra.mxu0 0
    %89 = vmatprep.subr.bf16.mxu0 0
    %90 = vmatpush1.bf16.msra.mxu0 0
    %91 = vmatprep.subr.bf16.mxu0 0
    %92 = vmatpush1.bf16.msra.mxu0 0
    %93 = vmatprep.subr.bf16.mxu0 0
    %94 = vmatpush1.bf16.msra.mxu0 0
    %95 = vmatprep.subr.bf16.mxu0 0
    %96 = vmatpush1.bf16.msra.mxu0 0
    %97 = vmatprep.subr.bf16.mxu0 0
    %98 = vmatpush1.bf16.msra.mxu0 0
    %99 = vmatprep.mubr.bf16.mxu0 0
    %100 = vmatmul.mubr.bf16.gmra.mrb[0].mxu0 %v65
    %v101 = vpop.f32.mrb[0].mxu0
    %v102 = vadd.f32 %v49, %v101
    %v103 = vpop.f32.mrb[0].mxu0
    %v104 = vpop.f32.mrb[0].mxu0
    %v105 = vadd.f32 %v49, %v104
    %v106 = vpop.f32.mrb[0].mxu0
    %107 = vdwg.mxu0
    %v108 = vmax.f32 %v102, 0.0
    %v109 = vmax.f32 %v105, 0.0
    %v110 = vsel %vm63, %v108, 0.0
    %111 = vadd.xlane.f32.xlu0 %v110
    %v112 = vpop.xlane.xlu0 %111
    %v113 = vsel %vm63, %v109, 0.0
    %114 = vadd.xlane.f32.xlu0 %v113
    %v115 = vpop.xlane.xlu0 %114
    %v116 = vrcp.pop 32.0
    %v117 = vmul.f32 %v112, %v116
    %v118 = vmul.f32 %v115, %v116
    %v119 = vsub.f32 %v108, %v117
    %v120 = vsub.f32 %v109, %v118
    %v121 = vmul.f32 %v119, %v119
    %v122 = vmul.f32 %v120, %v120
    %v123 = vsel %vm63, %v121, 0.0
    %124 = vadd.xlane.f32.xlu0 %v123
    %v125 = vpop.xlane.xlu0 %124
    %v126 = vsel %vm63, %v122, 0.0
    %127 = vadd.xlane.f32.xlu0 %v126
    %v128 = vpop.xlane.xlu0 %127
    %v129 = vmul.f32 %v125, %v116
    %v130 = vmul.f32 %v128, %v116
    %v131 = vadd.f32 %v129, 1e-05
    %v132 = vadd.f32 %v130, 1e-05
    %v133 = vrsqrt.pop %v131
    %v134 = vrsqrt.pop %v132
    %v135 = vmul.f32 %v119, %v133
    %v136 = vmul.f32 %v120, %v134
    %v137 = vld [vmem:[%s5] sm:$0x1]
    %v139 = vlaneseq
    %v140 = vshrl.u32 %v139, 7
    %v141 = vsub.s32 0, %v140
    %v142 = vrot.slane %v137, %v141
    %v144 = vmul.f32 %v135, %v142
    %v145 = vmul.f32 %v136, %v142
    %v146 = vld [vmem:[%s6] sm:$0x1]
    %v148 = vlaneseq
    %v149 = vshrl.u32 %v148, 7
    %v150 = vsub.s32 0, %v149
    %v151 = vrot.slane %v146, %v150
    %v153 = vadd.f32 %v144, %v151
    %v154 = vadd.f32 %v145, %v151
    %v155 = vpack.c.bf16 %v154, %v153
    %v156 = vld [vmem:[%s7] sm:$0xf]
    %v157 = vld [vmem:[%s7 + $0x4] sm:$0xf]
    %v158 = vld [vmem:[%s7 + $0x8] sm:$0xf]
    %v159 = vld [vmem:[%s7 + $0xc] sm:$0xf]
    %v160 = vld [vmem:[%s8] sm:$0x1]
    %v162 = vlaneseq
    %v163 = vshrl.u32 %v162, 7
    %v164 = vsub.s32 0, %v163
    %v165 = vrot.slane %v160, %v164
    %v171 = vunpack.c.l.b16 %v156
    %v172 = vunpack.c.l.b16 %v157
    %v173 = vunpack.c.l.b16 %v158
    %v174 = vunpack.c.l.b16 %v159
    %v175 = vpack.c.b16 %v172, %v171
    %v176 = vpack.c.b16 %v174, %v173
    %v180 = vsel %vm63, %v155, 0
    %182 = vmatprep.subr.bf16.mxu0 0
    %183 = vmatpush1.bf16.msra.mxu0 %v175
    %184 = vmatprep.subr.bf16.mxu0 0
    %185 = vmatpush1.bf16.msra.mxu0 %v176
    %186 = vmatprep.subr.bf16.mxu0 0
    %187 = vmatpush1.bf16.msra.mxu0 0
    %188 = vmatprep.subr.bf16.mxu0 0
    %189 = vmatpush1.bf16.msra.mxu0 0
    %190 = vmatprep.subr.bf16.mxu0 0
    %191 = vmatpush1.bf16.msra.mxu0 0
    %192 = vmatprep.subr.bf16.mxu0 0
    %193 = vmatpush1.bf16.msra.mxu0 0
    %194 = vmatprep.subr.bf16.mxu0 0
    %195 = vmatpush1.bf16.msra.mxu0 0
    %196 = vmatprep.subr.bf16.mxu0 0
    %197 = vmatpush1.bf16.msra.mxu0 0
    %198 = vmatprep.subr.bf16.mxu0 0
    %199 = vmatpush1.bf16.msra.mxu0 0
    %200 = vmatprep.subr.bf16.mxu0 0
    %201 = vmatpush1.bf16.msra.mxu0 0
    %202 = vmatprep.subr.bf16.mxu0 0
    %203 = vmatpush1.bf16.msra.mxu0 0
    %204 = vmatprep.subr.bf16.mxu0 0
    %205 = vmatpush1.bf16.msra.mxu0 0
    %206 = vmatprep.subr.bf16.mxu0 0
    %207 = vmatpush1.bf16.msra.mxu0 0
    %208 = vmatprep.subr.bf16.mxu0 0
    %209 = vmatpush1.bf16.msra.mxu0 0
    %210 = vmatprep.subr.bf16.mxu0 0
    %211 = vmatpush1.bf16.msra.mxu0 0
    %212 = vmatprep.subr.bf16.mxu0 0
    %213 = vmatpush1.bf16.msra.mxu0 0
    %214 = vmatprep.mubr.bf16.mxu0 0
    %215 = vmatmul.mubr.bf16.gmra.mrb[0].mxu0 %v180
    %v216 = vpop.f32.mrb[0].mxu0
    %v217 = vadd.f32 %v165, %v216
    %v218 = vpop.f32.mrb[0].mxu0
    %v219 = vpop.f32.mrb[0].mxu0
    %v220 = vadd.f32 %v165, %v219
    %v221 = vpop.f32.mrb[0].mxu0
    %222 = vdwg.mxu0
    %v223 = vld [vmem:[%s1] sm:$0xff]
    %v224 = vld [vmem:[%s1 + $0x8] sm:$0xff]
    %vm225 = vcmp.gt.f32.partialorder %v223, 0.0
    %vm226 = vcmp.gt.f32.partialorder %v224, 0.0
    %v227 = vsel %vm225, 1, 0
    %v228 = vsel %vm226, 1, 0
    %229 = vset.pattern.permute.xlu0 0
    %230 = vperm.xlu0 %229, %v227
    %v231 = vpop.permute.xlu0 %230
    %232 = vset.pattern.permute.xlu0 0
    %233 = vperm.xlu0 %232, %v228
    %v234 = vpop.permute.xlu0 %233
    %vm235 = vcmp.eq.s32.totalorder %v231, 1
    %vm236 = vcmp.eq.s32.totalorder %v234, 1
    %v237 = vsel %vm235, %v217, -1e+32
    %v238 = vsel %vm236, %v220, -1e+32
    %v239 = vlaneseq
    %v240 = vand.u32 %v239, 127
    %v241 = vld [vmem:[%s2] sm:$0xff]
    %v242 = vld [vmem:[%s2 + $0x8] sm:$0xff]
    %243 = vset.pattern.permute.xlu0 0
    %244 = vperm.xlu0 %243, %v241
    %v245 = vpop.permute.xlu0 %244
    %246 = vset.pattern.permute.xlu0 0
    %247 = vperm.xlu0 %246, %v242
    %v248 = vpop.permute.xlu0 %247
    %vm249 = vcmp.eq.s32.totalorder %v240, %v245
    %vm250 = vcmp.eq.s32.totalorder %v240, %v248
    %v251 = vsel %vm249, %v237, 0.0
    %v252 = vsel %vm250, %v238, 0.0
    %253 = vadd.xlane.f32.xlu0 %v251
    %v254 = vpop.xlane.xlu0 %253
    %255 = vadd.xlane.f32.xlu0 %v252
    %v256 = vpop.xlane.xlu0 %255
    %vm257 = vcmp.lt.s32.totalorder %v240, 16
    %v258 = vsel %vm257, %v237, -inf
    %v259 = vsel %vm257, %v238, -inf
    %260 = vmax.xlane.f32.xlu0 %v258
    %v261 = vpop.xlane.xlu0 %260
    %262 = vmax.xlane.f32.xlu0 %v259
    %v263 = vpop.xlane.xlu0 %262
    %v264 = vsub.f32 %v258, %v261
    %v265 = vsub.f32 %v259, %v263
    %v266 = vmul.f32 %v264, 1.442695
    %v267 = vpow.pop %v266
    %v268 = vmul.f32 %v265, 1.442695
    %v269 = vpow.pop %v268
    %270 = vadd.xlane.f32.xlu0 %v267
    %v271 = vpop.xlane.xlu0 %270
    %272 = vadd.xlane.f32.xlu0 %v269
    %v273 = vpop.xlane.xlu0 %272
    %v274 = vrcp.pop %v271
    %v275 = vmul.f32 1.0, %v274
    %v276 = vrcp.pop %v273
    %v277 = vmul.f32 1.0, %v276
    %v278 = vmul.f32 %v267, %v275
    %v279 = vmul.f32 %v269, %v277
    %280 = vst [vmem:[#allocation2] sm:$0xff] %v278
    %281 = vst [vmem:[#allocation2 + $0x8] sm:$0xff] %v279
    %v282 = vlog2.pop %v271
    %v283 = vmul.f32 %v282, 0.6931472
    %v284 = vlog2.pop %v273
    %v285 = vmul.f32 %v284, 0.6931472
    %v286 = vadd.f32 %v261, %v283
    %v287 = vadd.f32 %v263, %v285
    %vm288 = vcmp.ne.s32.totalorder %v241, 0
    %vm289 = vcmp.ne.s32.totalorder %v242, 0
    %v290 = vsel %vm288, 1, 0
    %v291 = vsel %vm289, 1, 0
    %v292 = vcvt.s32.f32 %v290
    %v293 = vcvt.s32.f32 %v291
    %v294 = vsub.f32 %v286, %v254
    %v295 = vsub.f32 %v287, %v256
    %v296 = vmul.f32 %v294, %v292
    %v297 = vmul.f32 %v295, %v293
    %vm298 = vcmask 7168
    %v299 = vsel %vm298, %v296, 0.0
    %v300 = vsel %vm298, %v297, 0.0
    %v301 = vadd.f32 %v299, %v300
    %302 = vadd.xlane.f32.xlu0 %v301
    %v303 = vpop.xlane.xlu0 %302
    %v304 = vrot.slane %v303, 4
    %v305 = vadd.f32 %v303, %v304
    %v306 = vrot.slane %v305, 2
    %v307 = vadd.f32 %v305, %v306
    %v308 = vrot.slane %v307, 1
    %v309 = vadd.f32 %v307, %v308
    %s310 = vtos %v309
    %v311 = vsel %vm298, %v292, 0.0
    %v312 = vsel %vm298, %v293, 0.0
    %v313 = vadd.f32 %v311, %v312
    %314 = vadd.xlane.f32.xlu0 %v313
    %v315 = vpop.xlane.xlu0 %314
    %v316 = vrot.slane %v315, 4
    %v317 = vadd.f32 %v315, %v316
    %v318 = vrot.slane %v317, 2
    %v319 = vadd.f32 %v317, %v318
    %v320 = vrot.slane %v319, 1
    %v321 = vadd.f32 %v319, %v320
    %s322 = vtos %v321
    %v323 = vlaneseq
    %v324 = vshrl.u32 %v323, 7
    %vm325 = vcmp.eq.s32.totalorder %v324, 0
    %vm326 = vcmp.eq.s32.totalorder %v240, 0
    %vm327 = vmand %vm325, %vm326
    %vm328 = vcmp.eq.s32.totalorder %v240, 1
    %vm329 = vmand %vm325, %vm328
    %v330 = vstv %s322
    %v331 = vsel %vm329, %v330, 0.0
    %v332 = vstv %s310
    %v333 = vsel %vm327, %v332, %v331
    %334 = vst [vmem:[#allocation4] sm:$0xff] %v333
    // Predicated region
    $region38: #{tpu_custom_call.1} parent=1 // pred_check
      _
    $region39: #{tpu_custom_call.1} parent=1 // pred_check_branch
      %336 = sbr.rel (0) target = $region41
    $region40: #{tpu_custom_call.1} parent=1 // pred_region
      %s338 = ssub.s32 256, 256
      %339 = vsyncadd [#allocation3], %s338
      %s340 = sshll.u32 [#allocation2], 4
      %s341 = int_to_ptr.vmem [resolvable:$true] %s340
      %346 = dma.vmem_to_hbm [thread:$0]  %s341, 256, %s9, [#allocation3], 128, 128, 8
    $region41: #{tpu_custom_call.1} parent=1 // pred_fallthru
      _
    // Predicated region
    $region42: #{tpu_custom_call.1} parent=1 // pred_check
      _
    $region43: #{tpu_custom_call.1} parent=1 // pred_check_branch
      %348 = sbr.rel (0) target = $region45
    $region44: #{tpu_custom_call.1} parent=1 // pred_region
      %s350 = ssub.s32 128, 128
      %351 = vsyncadd [#allocation5], %s350
      %s353 = sshll.u32 [#allocation4], 4
      %s354 = int_to_ptr.vmem [resolvable:$true] %s353
      %356 = dma.vmem_to_hbm [thread:$0]  %s354, 128, %s10, [#allocation5]
    $region45: #{tpu_custom_call.1} parent=1 // pred_fallthru
      _
    // Predicated region
    $region46: #{tpu_custom_call.1} parent=1 // pred_check
      _
    $region47: #{tpu_custom_call.1} parent=1 // pred_check_branch
      %358 = sbr.rel (0) target = $region49
    $region48: #{tpu_custom_call.1} parent=1 // pred_region
      %359 = dma.done [#allocation3], 256
    $region49: #{tpu_custom_call.1} parent=1 // pred_fallthru
      _
    // Predicated region
    $region50: #{tpu_custom_call.1} parent=1 // pred_check
      _
    $region51: #{tpu_custom_call.1} parent=1 // pred_check_branch
      %361 = sbr.rel (0) target = $region53
    $region52: #{tpu_custom_call.1} parent=1 // pred_region
      %362 = dma.done [#allocation5], 128
    $region53: #{tpu_custom_call.1} parent=1 // pred_fallthru
      _
    %363 = vsyncpa [#allocation3], 1
    %364 = vsyncpa [#allocation5], 1

</llo_original>
